<compile_context>
chip_gen: v7x
topology: tpu7x:2x2x1
jax: 0.10.0
libtpu: 0.0.40
codegen_flags: <defaults>
</compile_context>

<pallas_src>
import jax
import jax.numpy as jnp
from jax.experimental import pallas as pl
from jax.experimental.pallas import tpu as pltpu

EPS = 1e-5  # PyTorch nn.LayerNorm default


def patch_merging_kernel(x_ref, wt_ref, wb_ref, b_ref, o_ref):
    """One grid step: `tb` rows of the (B*H/2) axis -> tb*W2 merged patches.

    x_ref : (tb, 2, W2, 2C)  input view block; axis 1 is the h-parity,
                             the last dim packs (w-parity, C).
    wt_ref: (2C, 2C)         reduction weight rows for the [x0 | x2] channels
                             (LayerNorm gamma folded in), matmul dtype.
    wb_ref: (2C, 2C)         reduction weight rows for the [x1 | x3] channels.
    b_ref : (1, 2C)          beta @ W  (f32).
    o_ref : (tb, W2, 2C)     output block.
    """
    xb = x_ref[...].astype(jnp.float32)            # (tb, 2, W2, 2C)
    tb, _, w2, c2 = xb.shape
    rows = tb * w2

    # Natural packing of each merged patch: top = [x0 | x2], bot = [x1 | x3].
    # (reshape merges leading dims only; free when W2 % 8 == 0)
    top = xb[:, 0].reshape(rows, c2)
    bot = xb[:, 1].reshape(rows, c2)
    n = 2.0 * c2                                   # = 4C, LayerNorm width

    # LayerNorm statistics over the full 4C group (split across top/bot), f32,
    # biased variance — matches nn.LayerNorm.
    mean = (jnp.sum(top, axis=-1, keepdims=True)
            + jnp.sum(bot, axis=-1, keepdims=True)) / n
    ct = top - mean
    cb = bot - mean
    var = (jnp.sum(ct * ct, axis=-1, keepdims=True)
           + jnp.sum(cb * cb, axis=-1, keepdims=True)) / n
    inv = jax.lax.rsqrt(var + EPS)

    # Affine + reduction, with the affine folded into the (re-grouped) weights:
    #   out = (xn * gamma + beta) @ W = xn_top @ W_top + xn_bot @ W_bot + beta @ W
    mm_dtype = wt_ref.dtype
    y = jnp.dot((ct * inv).astype(mm_dtype), wt_ref[...],
                preferred_element_type=jnp.float32)
    y = y + jnp.dot((cb * inv).astype(mm_dtype), wb_ref[...],
                    preferred_element_type=jnp.float32)
    y = y + b_ref[...]
    o_ref[...] = y.reshape(tb, w2, y.shape[-1]).astype(o_ref.dtype)


def _pick_row_tile(R, W2, target_rows):
    """Largest divisor `tb` of R with tb*W2 <= target_rows merged rows/tile."""
    tb = 1
    for d in range(1, R + 1):
        if R % d == 0 and d * W2 <= target_rows:
            tb = d
    return tb


def patch_merging(x, input_resolution, gamma, beta, weight, *,
                  matmul_dtype=jnp.bfloat16, target_rows=512,
                  vmem_limit_bytes=None):
    """x: (B, H*W, C) -> (B, (H/2)*(W/2), 2*C).

    `weight` is (4C, 2C), i.e. already transposed w.r.t. PyTorch's (out, in)
    nn.Linear layout (out = x @ weight).
    """
    H, W = input_resolution
    B, L, C = x.shape
    assert L == H * W, "input feature has wrong size"
    assert H % 2 == 0 and W % 2 == 0, f"x size ({H}*{W}) are not even."
    H2, W2 = H // 2, W // 2
    R = B * H2                                  # one row per (b, h2)

    # Free row-major view (no HBM copy): (B, H*W, C) == (B*H2, 2, W2, 2*C).
    xr = x.reshape(R, 2, W2, 2 * C)

    # Host-side (one-time, tiny): fold LN affine into the weight and re-group
    # its rows to the kernel's natural channel packing.
    #   pytorch channel order: [x0, x1, x2, x3]; kernel packing:
    #   top = [x0 | x2], bot = [x1 | x3].
    w32 = weight.astype(jnp.float32)
    w_aff = gamma.astype(jnp.float32)[:, None] * w32                 # (4C, 2C)
    w_top = jnp.concatenate([w_aff[0:C], w_aff[2 * C:3 * C]], axis=0)
    w_bot = jnp.concatenate([w_aff[C:2 * C], w_aff[3 * C:4 * C]], axis=0)
    w_top = w_top.astype(matmul_dtype)
    w_bot = w_bot.astype(matmul_dtype)
    b_eff = (beta.astype(jnp.float32) @ w32).reshape(1, 2 * C)        # f32

    tb = _pick_row_tile(R, W2, target_rows)
    grid = (R // tb,)

    out = pl.pallas_call(
        patch_merging_kernel,
        out_shape=jax.ShapeDtypeStruct((R, W2, 2 * C), x.dtype),
        grid=grid,
        in_specs=[
            pl.BlockSpec((tb, 2, W2, 2 * C), lambda i: (i, 0, 0, 0)),
            # Weights / bias are grid-invariant; bf16 halves their VMEM cost.
            # (If VMEM-tight on v7x deep stages, they could additionally be
            #  single-buffered via pipeline_mode, or target_rows lowered.)
            pl.BlockSpec((2 * C, 2 * C), lambda i: (0, 0)),
            pl.BlockSpec((2 * C, 2 * C), lambda i: (0, 0)),
            pl.BlockSpec((1, 2 * C), lambda i: (0, 0)),
        ],
        out_specs=pl.BlockSpec((tb, W2, 2 * C), lambda i: (i, 0, 0)),
        compiler_params=pltpu.CompilerParams(
            dimension_semantics=("parallel",),
            vmem_limit_bytes=vmem_limit_bytes,
        ),
    )(xr, w_top, w_bot, b_eff)

    return out.reshape(B, H2 * W2, 2 * C)


def _reference(x, input_resolution, gamma, beta, weight):
    """Pure-JAX f32 reference matching the PyTorch module."""
    H, W = input_resolution
    B, L, C = x.shape
    xv = x.reshape(B, H, W, C)
    x0 = xv[:, 0::2, 0::2, :]
    x1 = xv[:, 1::2, 0::2, :]
    x2 = xv[:, 0::2, 1::2, :]
    x3 = xv[:, 1::2, 1::2, :]
    xm = jnp.concatenate([x0, x1, x2, x3], axis=-1).reshape(B, -1, 4 * C)
    mu = jnp.mean(xm, axis=-1, keepdims=True)
    var = jnp.mean((xm - mu) ** 2, axis=-1, keepdims=True)
    xn = (xm - mu) * jax.lax.rsqrt(var + EPS)
    return (xn * gamma + beta) @ weight


if __name__ == "__main__":
    # Small shapes consistent with the module: B=2, dim=C=4, H=W=16 -> L=256.
    B, H, W, C = 2, 16, 16, 4
    key = jax.random.PRNGKey(0)
    kx, kw, kg, kb = jax.random.split(key, 4)

    x = jax.random.normal(kx, (B, H * W, C), dtype=jnp.float32)
    gamma = 1.0 + 0.1 * jax.random.normal(kg, (4 * C,), dtype=jnp.float32)
    beta = 0.05 * jax.random.normal(kb, (4 * C,), dtype=jnp.float32)
    weight = jax.random.normal(kw, (4 * C, 2 * C), dtype=jnp.float32) * 0.02

    y = patch_merging(x, (H, W), gamma, beta, weight)
    jax.block_until_ready(y)
    assert y.shape == (B, (H // 2) * (W // 2), 2 * C), y.shape

    y_ref = _reference(x, (H, W), gamma, beta, weight)
    max_err = float(jnp.max(jnp.abs(y - y_ref)))
    assert jnp.allclose(y, y_ref, rtol=2e-2, atol=2e-2), max_err

    print("KERNEL_OK")
</pallas_src>

<mosaic_0001>
module attributes {stable_mosaic.version = 11 : i64} {
  func.func @patch_merging_kernel(%arg0: i32, %arg1: memref<16x2x8x8xf32, #tpu.memory_space<vmem>>, %arg2: memref<8x8xbf16, #tpu.memory_space<vmem>>, %arg3: memref<8x8xbf16, #tpu.memory_space<vmem>>, %arg4: memref<1x8xf32, #tpu.memory_space<vmem>>, %arg5: memref<16x8x8xf32, #tpu.memory_space<vmem>>) attributes {dimension_semantics = [#tpu.dimension_semantics<parallel>], iteration_bounds = array<i64: 1>, scalar_prefetch = 0 : i64, scratch_operands = 0 : i64, tpu.core_type = #tpu.core_type<tc>, window_params = [{transform_indices = @transform_0, window_bounds = array<i64: 16, 2, 8, 8>}, {pipeline_mode = #tpu.pipeline_mode<synchronous>, transform_indices = @transform_1, window_bounds = array<i64: 8, 8>}, {pipeline_mode = #tpu.pipeline_mode<synchronous>, transform_indices = @transform_2, window_bounds = array<i64: 8, 8>}, {pipeline_mode = #tpu.pipeline_mode<synchronous>, transform_indices = @transform_3, window_bounds = array<i64: 1, 8>}, {transform_indices = @transform_4, window_bounds = array<i64: 16, 8, 8>}]} {
    %c0 = arith.constant 0 : index
    %c0_0 = arith.constant 0 : index
    %c0_1 = arith.constant 0 : index
    %c0_2 = arith.constant 0 : index
    %0 = vector.load %arg1[%c0, %c0_0, %c0_1, %c0_2] : memref<16x2x8x8xf32, #tpu.memory_space<vmem>>, vector<16x2x8x8xf32>
    %1 = vector.extract_strided_slice %0 {offsets = [0, 0, 0, 0], sizes = [16, 1, 8, 8], strides = [1, 1, 1, 1]} : vector<16x2x8x8xf32> to vector<16x1x8x8xf32>
    %2 = vector.shape_cast %1 : vector<16x1x8x8xf32> to vector<16x8x8xf32>
    %3 = vector.shape_cast %2 : vector<16x8x8xf32> to vector<128x8xf32>
    %4 = vector.extract_strided_slice %0 {offsets = [0, 1, 0, 0], sizes = [16, 1, 8, 8], strides = [1, 1, 1, 1]} : vector<16x2x8x8xf32> to vector<16x1x8x8xf32>
    %5 = vector.shape_cast %4 : vector<16x1x8x8xf32> to vector<16x8x8xf32>
    %6 = vector.shape_cast %5 : vector<16x8x8xf32> to vector<128x8xf32>
    %cst = arith.constant dense<0.000000e+00> : vector<128xf32>
    %7 = vector.multi_reduction <add>, %3, %cst [1] : vector<128x8xf32> to vector<128xf32>
    %8 = vector.shape_cast %7 : vector<128xf32> to vector<128x1xf32>
    %cst_3 = arith.constant dense<0.000000e+00> : vector<128xf32>
    %9 = vector.multi_reduction <add>, %6, %cst_3 [1] : vector<128x8xf32> to vector<128xf32>
    %10 = vector.shape_cast %9 : vector<128xf32> to vector<128x1xf32>
    %11 = arith.addf %8, %10 : vector<128x1xf32>
    %cst_4 = arith.constant 1.600000e+01 : f32
    %12 = vector.broadcast %cst_4 : f32 to vector<128x1xf32>
    %13 = arith.divf %11, %12 : vector<128x1xf32>
    %14 = vector.broadcast %13 : vector<128x1xf32> to vector<128x8xf32>
    %15 = arith.subf %3, %14 : vector<128x8xf32>
    %16 = vector.broadcast %13 : vector<128x1xf32> to vector<128x8xf32>
    %17 = arith.subf %6, %16 : vector<128x8xf32>
    %18 = arith.mulf %15, %15 : vector<128x8xf32>
    %cst_5 = arith.constant dense<0.000000e+00> : vector<128xf32>
    %19 = vector.multi_reduction <add>, %18, %cst_5 [1] : vector<128x8xf32> to vector<128xf32>
    %20 = vector.shape_cast %19 : vector<128xf32> to vector<128x1xf32>
    %21 = arith.mulf %17, %17 : vector<128x8xf32>
    %cst_6 = arith.constant dense<0.000000e+00> : vector<128xf32>
    %22 = vector.multi_reduction <add>, %21, %cst_6 [1] : vector<128x8xf32> to vector<128xf32>
    %23 = vector.shape_cast %22 : vector<128xf32> to vector<128x1xf32>
    %24 = arith.addf %20, %23 : vector<128x1xf32>
    %cst_7 = arith.constant 1.600000e+01 : f32
    %25 = vector.broadcast %cst_7 : f32 to vector<128x1xf32>
    %26 = arith.divf %24, %25 : vector<128x1xf32>
    %cst_8 = arith.constant 9.99999974E-6 : f32
    %27 = vector.broadcast %cst_8 : f32 to vector<128x1xf32>
    %28 = arith.addf %26, %27 : vector<128x1xf32>
    %29 = math.rsqrt %28 : vector<128x1xf32>
    %30 = vector.broadcast %29 : vector<128x1xf32> to vector<128x8xf32>
    %31 = arith.mulf %15, %30 : vector<128x8xf32>
    %32 = arith.truncf %31 : vector<128x8xf32> to vector<128x8xbf16>
    %c0_9 = arith.constant 0 : index
    %c0_10 = arith.constant 0 : index
    %33 = vector.load %arg2[%c0_9, %c0_10] : memref<8x8xbf16, #tpu.memory_space<vmem>>, vector<8x8xbf16>
    %cst_11 = arith.constant dense<0.000000e+00> : vector<128x8xf32>
    %34 = tpu.matmul %32, %33, %cst_11 {dimension_numbers = #tpu.dot_dimension_numbers<[1], [0], [0], [1], [0, 0, 1, 1], [], []>} : vector<128x8xbf16>, vector<8x8xbf16>, vector<128x8xf32> -> vector<128x8xf32>
    %35 = vector.broadcast %29 : vector<128x1xf32> to vector<128x8xf32>
    %36 = arith.mulf %17, %35 : vector<128x8xf32>
    %37 = arith.truncf %36 : vector<128x8xf32> to vector<128x8xbf16>
    %c0_12 = arith.constant 0 : index
    %c0_13 = arith.constant 0 : index
    %38 = vector.load %arg3[%c0_12, %c0_13] : memref<8x8xbf16, #tpu.memory_space<vmem>>, vector<8x8xbf16>
    %cst_14 = arith.constant dense<0.000000e+00> : vector<128x8xf32>
    %39 = tpu.matmul %37, %38, %cst_14 {dimension_numbers = #tpu.dot_dimension_numbers<[1], [0], [0], [1], [0, 0, 1, 1], [], []>} : vector<128x8xbf16>, vector<8x8xbf16>, vector<128x8xf32> -> vector<128x8xf32>
    %40 = arith.addf %34, %39 : vector<128x8xf32>
    %c0_15 = arith.constant 0 : index
    %c0_16 = arith.constant 0 : index
    %41 = vector.load %arg4[%c0_15, %c0_16] : memref<1x8xf32, #tpu.memory_space<vmem>>, vector<1x8xf32>
    %42 = vector.broadcast %41 : vector<1x8xf32> to vector<128x8xf32>
    %43 = arith.addf %40, %42 : vector<128x8xf32>
    %44 = vector.shape_cast %43 : vector<128x8xf32> to vector<16x8x8xf32>
    %c0_17 = arith.constant 0 : index
    %c0_18 = arith.constant 0 : index
    %c0_19 = arith.constant 0 : index
    %45 = vector.load %arg5[%c0_17, %c0_18, %c0_19] : memref<16x8x8xf32, #tpu.memory_space<vmem>>, vector<16x8x8xf32>
    tpu.vector_store %arg5[%c0_17, %c0_18, %c0_19], %44 {strides = array<i32>} : memref<16x8x8xf32, #tpu.memory_space<vmem>>, vector<16x8x8xf32>,
    return
  }
  func.func @transform_0(%arg0: i32) -> (i32, i32, i32, i32) {
    %c0_i32 = arith.constant 0 : i32
    %c0_i32_0 = arith.constant 0 : i32
    %c0_i32_1 = arith.constant 0 : i32
    %c0_i32_2 = arith.constant 0 : i32
    return %arg0, %c0_i32, %c0_i32_0, %c0_i32_1 : i32, i32, i32, i32
  }
  func.func @transform_1(%arg0: i32) -> (i32, i32) {
    %c0_i32 = arith.constant 0 : i32
    %c0_i32_0 = arith.constant 0 : i32
    %c0_i32_1 = arith.constant 0 : i32
    return %c0_i32, %c0_i32_0 : i32, i32
  }
  func.func @transform_2(%arg0: i32) -> (i32, i32) {
    %c0_i32 = arith.constant 0 : i32
    %c0_i32_0 = arith.constant 0 : i32
    %c0_i32_1 = arith.constant 0 : i32
    return %c0_i32, %c0_i32_0 : i32, i32
  }
  func.func @transform_3(%arg0: i32) -> (i32, i32) {
    %c0_i32 = arith.constant 0 : i32
    %c0_i32_0 = arith.constant 0 : i32
    %c0_i32_1 = arith.constant 0 : i32
    return %c0_i32, %c0_i32_0 : i32, i32
  }
  func.func @transform_4(%arg0: i32) -> (i32, i32, i32) {
    %c0_i32 = arith.constant 0 : i32
    %c0_i32_0 = arith.constant 0 : i32
    %c0_i32_1 = arith.constant 0 : i32
    return %arg0, %c0_i32, %c0_i32_0 : i32, i32, i32
  }
}

</mosaic_0001>

<llo_original>
// kernel: tpu_custom_call.1
$region0: #{tpu_custom_call.1}
  #allocation0 [shape = 'u32[]', space=smem, size = 0x4, offset = 0x4, fixed_abs, tag = 'smem constant byte address 0x4 - core index']
  #allocation1 [shape = 'u32[144,128]{1,0:T(1,128)}', space=vmem, size = 0x12000, scoped, tag = 'internal scratch']
  %s0 = inlined_call_operand.vmem [shape: f32[16,2,8,8], index: 0, kind: input, shape index: {}]
  %s1 = inlined_call_operand.vmem [shape: bf16[8,8], index: 1, kind: input, shape index: {}]
  %s2 = inlined_call_operand.vmem [shape: bf16[8,8], index: 2, kind: input, shape index: {}]
  %s3 = inlined_call_operand.vmem [shape: f32[1,8], index: 3, kind: input, shape index: {}]
  %s4 = inlined_call_operand.vmem [shape: f32[16,8,8], index: 4, kind: output, shape index: {}]
  %s5 = sld [smem:[#allocation0]]
  $region26: #{tpu_custom_call.1} parent=0
    _
  %s7 = ssub.s32 1, %s5
  %s8 = scalar_select 0, %s7, %s5
  // Predicated region
  $region2: #{tpu_custom_call.1} parent=0 // pred_check
    _
  $region3: #{tpu_custom_call.1} parent=0 // pred_check_branch
    %10 = sbr.rel (0) target = $region5
  $region4: #{tpu_custom_call.1} parent=0 // pred_region
    _
  $region5: #{tpu_custom_call.1} parent=0 // pred_fallthru
    _
  // Predicated region
  $region6: #{tpu_custom_call.1} parent=0 // pred_check
    _
  $region7: #{tpu_custom_call.1} parent=0 // pred_check_branch
    %12 = sbr.rel (0) target = $region9
  $region8: #{tpu_custom_call.1} parent=0 // pred_region
    _
  $region9: #{tpu_custom_call.1} parent=0 // pred_fallthru
    _
  // Predicated region
  $region10: #{tpu_custom_call.1} parent=0 // pred_check
    _
  $region11: #{tpu_custom_call.1} parent=0 // pred_check_branch
    %14 = sbr.rel (0) target = $region13
  $region12: #{tpu_custom_call.1} parent=0 // pred_region
    _
  $region13: #{tpu_custom_call.1} parent=0 // pred_fallthru
    _
  // Predicated region
  $region14: #{tpu_custom_call.1} parent=0 // pred_check
    _
  $region15: #{tpu_custom_call.1} parent=0 // pred_check_branch
    %16 = sbr.rel (0) target = $region17
  $region16: #{tpu_custom_call.1} parent=0 // pred_region
    _
  $region17: #{tpu_custom_call.1} parent=0 // pred_fallthru
    _
  %v18 = vld [vmem:[%s0] sm:$0xff]
  %v19 = vld [vmem:[%s0 + $0x8] sm:$0xff]
  %v20 = vld [vmem:[%s0 + $0x10] sm:$0xff]
  %v21 = vld [vmem:[%s0 + $0x18] sm:$0xff]
  %v22 = vld [vmem:[%s0 + $0x20] sm:$0xff]
  %v23 = vld [vmem:[%s0 + $0x28] sm:$0xff]
  %v24 = vld [vmem:[%s0 + $0x30] sm:$0xff]
  %v25 = vld [vmem:[%s0 + $0x38] sm:$0xff]
  %v26 = vld [vmem:[%s0 + $0x40] sm:$0xff]
  %v27 = vld [vmem:[%s0 + $0x48] sm:$0xff]
  %v28 = vld [vmem:[%s0 + $0x50] sm:$0xff]
  %v29 = vld [vmem:[%s0 + $0x58] sm:$0xff]
  %v30 = vld [vmem:[%s0 + $0x60] sm:$0xff]
  %v31 = vld [vmem:[%s0 + $0x68] sm:$0xff]
  %v32 = vld [vmem:[%s0 + $0x70] sm:$0xff]
  %v33 = vld [vmem:[%s0 + $0x78] sm:$0xff]
  %v34 = vld [vmem:[%s0 + $0x80] sm:$0xff]
  %v35 = vld [vmem:[%s0 + $0x88] sm:$0xff]
  %v36 = vld [vmem:[%s0 + $0x90] sm:$0xff]
  %v37 = vld [vmem:[%s0 + $0x98] sm:$0xff]
  %v38 = vld [vmem:[%s0 + $0xa0] sm:$0xff]
  %v39 = vld [vmem:[%s0 + $0xa8] sm:$0xff]
  %v40 = vld [vmem:[%s0 + $0xb0] sm:$0xff]
  %v41 = vld [vmem:[%s0 + $0xb8] sm:$0xff]
  %v42 = vld [vmem:[%s0 + $0xc0] sm:$0xff]
  %v43 = vld [vmem:[%s0 + $0xc8] sm:$0xff]
  %v44 = vld [vmem:[%s0 + $0xd0] sm:$0xff]
  %v45 = vld [vmem:[%s0 + $0xd8] sm:$0xff]
  %v46 = vld [vmem:[%s0 + $0xe0] sm:$0xff]
  %v47 = vld [vmem:[%s0 + $0xe8] sm:$0xff]
  %v48 = vld [vmem:[%s0 + $0xf0] sm:$0xff]
  %v49 = vld [vmem:[%s0 + $0xf8] sm:$0xff]
  %vm50 = vcmask 64512
  %v51 = vsel %vm50, %v18, 0.0
  %52 = vadd.xlane.f32.xlu0 %v51
  %v53 = vpop.xlane.xlu0 %52
  %v54 = vsel %vm50, %v20, 0.0
  %55 = vadd.xlane.f32.xlu0 %v54
  %v56 = vpop.xlane.xlu0 %55
  %v57 = vsel %vm50, %v22, 0.0
  %58 = vadd.xlane.f32.xlu0 %v57
  %v59 = vpop.xlane.xlu0 %58
  %v60 = vsel %vm50, %v24, 0.0
  %61 = vadd.xlane.f32.xlu0 %v60
  %v62 = vpop.xlane.xlu0 %61
  %v63 = vsel %vm50, %v26, 0.0
  %64 = vadd.xlane.f32.xlu0 %v63
  %v65 = vpop.xlane.xlu0 %64
  %v66 = vsel %vm50, %v28, 0.0
  %67 = vadd.xlane.f32.xlu0 %v66
  %v68 = vpop.xlane.xlu0 %67
  %v69 = vsel %vm50, %v30, 0.0
  %70 = vadd.xlane.f32.xlu0 %v69
  %v71 = vpop.xlane.xlu0 %70
  %v72 = vsel %vm50, %v32, 0.0
  %73 = vadd.xlane.f32.xlu0 %v72
  %v74 = vpop.xlane.xlu0 %73
  %v75 = vsel %vm50, %v34, 0.0
  %76 = vadd.xlane.f32.xlu0 %v75
  %v77 = vpop.xlane.xlu0 %76
  %v78 = vsel %vm50, %v36, 0.0
  %79 = vadd.xlane.f32.xlu0 %v78
  %v80 = vpop.xlane.xlu0 %79
  %v81 = vsel %vm50, %v38, 0.0
  %82 = vadd.xlane.f32.xlu0 %v81
  %v83 = vpop.xlane.xlu0 %82
  %v84 = vsel %vm50, %v40, 0.0
  %85 = vadd.xlane.f32.xlu0 %v84
  %v86 = vpop.xlane.xlu0 %85
  %v87 = vsel %vm50, %v42, 0.0
  %88 = vadd.xlane.f32.xlu0 %v87
  %v89 = vpop.xlane.xlu0 %88
  %v90 = vsel %vm50, %v44, 0.0
  %91 = vadd.xlane.f32.xlu0 %v90
  %v92 = vpop.xlane.xlu0 %91
  %v93 = vsel %vm50, %v46, 0.0
  %94 = vadd.xlane.f32.xlu0 %v93
  %v95 = vpop.xlane.xlu0 %94
  %v96 = vsel %vm50, %v48, 0.0
  %97 = vadd.xlane.f32.xlu0 %v96
  %v98 = vpop.xlane.xlu0 %97
  %v99 = vsel %vm50, %v19, 0.0
  %100 = vadd.xlane.f32.xlu0 %v99
  %v101 = vpop.xlane.xlu0 %100
  %v102 = vsel %vm50, %v21, 0.0
  %103 = vadd.xlane.f32.xlu0 %v102
  %v104 = vpop.xlane.xlu0 %103
  %v105 = vsel %vm50, %v23, 0.0
  %106 = vadd.xlane.f32.xlu0 %v105
  %v107 = vpop.xlane.xlu0 %106
  %v108 = vsel %vm50, %v25, 0.0
  %109 = vadd.xlane.f32.xlu0 %v108
  %v110 = vpop.xlane.xlu0 %109
  %v111 = vsel %vm50, %v27, 0.0
  %112 = vadd.xlane.f32.xlu0 %v111
  %v113 = vpop.xlane.xlu0 %112
  %v114 = vsel %vm50, %v29, 0.0
  %115 = vadd.xlane.f32.xlu0 %v114
  %v116 = vpop.xlane.xlu0 %115
  %v117 = vsel %vm50, %v31, 0.0
  %118 = vadd.xlane.f32.xlu0 %v117
  %v119 = vpop.xlane.xlu0 %118
  %v120 = vsel %vm50, %v33, 0.0
  %121 = vadd.xlane.f32.xlu0 %v120
  %v122 = vpop.xlane.xlu0 %121
  %v123 = vsel %vm50, %v35, 0.0
  %124 = vadd.xlane.f32.xlu0 %v123
  %v125 = vpop.xlane.xlu0 %124
  %v126 = vsel %vm50, %v37, 0.0
  %127 = vadd.xlane.f32.xlu0 %v126
  %v128 = vpop.xlane.xlu0 %127
  %v129 = vsel %vm50, %v39, 0.0
  %130 = vadd.xlane.f32.xlu0 %v129
  %v131 = vpop.xlane.xlu0 %130
  %v132 = vsel %vm50, %v41, 0.0
  %133 = vadd.xlane.f32.xlu0 %v132
  %v134 = vpop.xlane.xlu0 %133
  %v135 = vsel %vm50, %v43, 0.0
  %136 = vadd.xlane.f32.xlu0 %v135
  %v137 = vpop.xlane.xlu0 %136
  %v138 = vsel %vm50, %v45, 0.0
  %139 = vadd.xlane.f32.xlu0 %v138
  %v140 = vpop.xlane.xlu0 %139
  %v141 = vsel %vm50, %v47, 0.0
  %142 = vadd.xlane.f32.xlu0 %v141
  %v143 = vpop.xlane.xlu0 %142
  %v144 = vsel %vm50, %v49, 0.0
  %145 = vadd.xlane.f32.xlu0 %v144
  %v146 = vpop.xlane.xlu0 %145
  %v147 = vadd.f32 %v53, %v101
  %v148 = vadd.f32 %v56, %v104
  %v149 = vadd.f32 %v59, %v107
  %v150 = vadd.f32 %v62, %v110
  %v151 = vadd.f32 %v65, %v113
  %v152 = vadd.f32 %v68, %v116
  %v153 = vadd.f32 %v71, %v119
  %v154 = vadd.f32 %v74, %v122
  %v155 = vadd.f32 %v77, %v125
  %v156 = vadd.f32 %v80, %v128
  %v157 = vadd.f32 %v83, %v131
  %v158 = vadd.f32 %v86, %v134
  %v159 = vadd.f32 %v89, %v137
  %v160 = vadd.f32 %v92, %v140
  %v161 = vadd.f32 %v95, %v143
  %v162 = vadd.f32 %v98, %v146
  %v163 = vrcp.pop 16.0
  %v164 = vmul.f32 %v147, %v163
  %v165 = vmul.f32 %v148, %v163
  %v166 = vmul.f32 %v149, %v163
  %v167 = vmul.f32 %v150, %v163
  %v168 = vmul.f32 %v151, %v163
  %v169 = vmul.f32 %v152, %v163
  %v170 = vmul.f32 %v153, %v163
  %v171 = vmul.f32 %v154, %v163
  %v172 = vmul.f32 %v155, %v163
  %v173 = vmul.f32 %v156, %v163
  %v174 = vmul.f32 %v157, %v163
  %v175 = vmul.f32 %v158, %v163
  %v176 = vmul.f32 %v159, %v163
  %v177 = vmul.f32 %v160, %v163
  %v178 = vmul.f32 %v161, %v163
  %v179 = vmul.f32 %v162, %v163
  %v180 = vsub.f32 %v18, %v164
  %v181 = vsub.f32 %v20, %v165
  %v182 = vsub.f32 %v22, %v166
  %v183 = vsub.f32 %v24, %v167
  %v184 = vsub.f32 %v26, %v168
  %v185 = vsub.f32 %v28, %v169
  %v186 = vsub.f32 %v30, %v170
  %v187 = vsub.f32 %v32, %v171
  %v188 = vsub.f32 %v34, %v172
  %v189 = vsub.f32 %v36, %v173
  %v190 = vsub.f32 %v38, %v174
  %v191 = vsub.f32 %v40, %v175
  %v192 = vsub.f32 %v42, %v176
  %v193 = vsub.f32 %v44, %v177
  %v194 = vsub.f32 %v46, %v178
  %v195 = vsub.f32 %v48, %v179
  %v196 = vsub.f32 %v19, %v164
  %v197 = vsub.f32 %v21, %v165
  %v198 = vsub.f32 %v23, %v166
  %v199 = vsub.f32 %v25, %v167
  %v200 = vsub.f32 %v27, %v168
  %v201 = vsub.f32 %v29, %v169
  %v202 = vsub.f32 %v31, %v170
  %v203 = vsub.f32 %v33, %v171
  %v204 = vsub.f32 %v35, %v172
  %v205 = vsub.f32 %v37, %v173
  %v206 = vsub.f32 %v39, %v174
  %v207 = vsub.f32 %v41, %v175
  %v208 = vsub.f32 %v43, %v176
  %v209 = vsub.f32 %v45, %v177
  %v210 = vsub.f32 %v47, %v178
  %v211 = vsub.f32 %v49, %v179
  %v212 = vmul.f32 %v180, %v180
  %v213 = vmul.f32 %v181, %v181
  %v214 = vmul.f32 %v182, %v182
  %v215 = vmul.f32 %v183, %v183
  %v216 = vmul.f32 %v184, %v184
  %v217 = vmul.f32 %v185, %v185
  %v218 = vmul.f32 %v186, %v186
  %v219 = vmul.f32 %v187, %v187
  %v220 = vmul.f32 %v188, %v188
  %v221 = vmul.f32 %v189, %v189
  %v222 = vmul.f32 %v190, %v190
  %v223 = vmul.f32 %v191, %v191
  %v224 = vmul.f32 %v192, %v192
  %v225 = vmul.f32 %v193, %v193
  %v226 = vmul.f32 %v194, %v194
  %v227 = vmul.f32 %v195, %v195
  %v228 = vsel %vm50, %v212, 0.0
  %229 = vadd.xlane.f32.xlu0 %v228
  %v230 = vpop.xlane.xlu0 %229
  %v231 = vsel %vm50, %v213, 0.0
  %232 = vadd.xlane.f32.xlu0 %v231
  %v233 = vpop.xlane.xlu0 %232
  %v234 = vsel %vm50, %v214, 0.0
  %235 = vadd.xlane.f32.xlu0 %v234
  %v236 = vpop.xlane.xlu0 %235
  %v237 = vsel %vm50, %v215, 0.0
  %238 = vadd.xlane.f32.xlu0 %v237
  %v239 = vpop.xlane.xlu0 %238
  %v240 = vsel %vm50, %v216, 0.0
  %241 = vadd.xlane.f32.xlu0 %v240
  %v242 = vpop.xlane.xlu0 %241
  %v243 = vsel %vm50, %v217, 0.0
  %244 = vadd.xlane.f32.xlu0 %v243
  %v245 = vpop.xlane.xlu0 %244
  %v246 = vsel %vm50, %v218, 0.0
  %247 = vadd.xlane.f32.xlu0 %v246
  %v248 = vpop.xlane.xlu0 %247
  %v249 = vsel %vm50, %v219, 0.0
  %250 = vadd.xlane.f32.xlu0 %v249
  %v251 = vpop.xlane.xlu0 %250
  %v252 = vsel %vm50, %v220, 0.0
  %253 = vadd.xlane.f32.xlu0 %v252
  %v254 = vpop.xlane.xlu0 %253
  %v255 = vsel %vm50, %v221, 0.0
  %256 = vadd.xlane.f32.xlu0 %v255
  %v257 = vpop.xlane.xlu0 %256
  %v258 = vsel %vm50, %v222, 0.0
  %259 = vadd.xlane.f32.xlu0 %v258
  %v260 = vpop.xlane.xlu0 %259
  %v261 = vsel %vm50, %v223, 0.0
  %262 = vadd.xlane.f32.xlu0 %v261
  %v263 = vpop.xlane.xlu0 %262
  %v264 = vsel %vm50, %v224, 0.0
  %265 = vadd.xlane.f32.xlu0 %v264
  %v266 = vpop.xlane.xlu0 %265
  %v267 = vsel %vm50, %v225, 0.0
  %268 = vadd.xlane.f32.xlu0 %v267
  %v269 = vpop.xlane.xlu0 %268
  %v270 = vsel %vm50, %v226, 0.0
  %271 = vadd.xlane.f32.xlu0 %v270
  %v272 = vpop.xlane.xlu0 %271
  %v273 = vsel %vm50, %v227, 0.0
  %274 = vadd.xlane.f32.xlu0 %v273
  %v275 = vpop.xlane.xlu0 %274
  %v276 = vmul.f32 %v196, %v196
  %v277 = vmul.f32 %v197, %v197
  %v278 = vmul.f32 %v198, %v198
  %v279 = vmul.f32 %v199, %v199
  %v280 = vmul.f32 %v200, %v200
  %v281 = vmul.f32 %v201, %v201
  %v282 = vmul.f32 %v202, %v202
  %v283 = vmul.f32 %v203, %v203
  %v284 = vmul.f32 %v204, %v204
  %v285 = vmul.f32 %v205, %v205
  %v286 = vmul.f32 %v206, %v206
  %v287 = vmul.f32 %v207, %v207
  %v288 = vmul.f32 %v208, %v208
  %v289 = vmul.f32 %v209, %v209
  %v290 = vmul.f32 %v210, %v210
  %v291 = vmul.f32 %v211, %v211
  %v292 = vsel %vm50, %v276, 0.0
  %293 = vadd.xlane.f32.xlu0 %v292
  %v294 = vpop.xlane.xlu0 %293
  %v295 = vsel %vm50, %v277, 0.0
  %296 = vadd.xlane.f32.xlu0 %v295
  %v297 = vpop.xlane.xlu0 %296
  %v298 = vsel %vm50, %v278, 0.0
  %299 = vadd.xlane.f32.xlu0 %v298
  %v300 = vpop.xlane.xlu0 %299
  %v301 = vsel %vm50, %v279, 0.0
  %302 = vadd.xlane.f32.xlu0 %v301
  %v303 = vpop.xlane.xlu0 %302
  %v304 = vsel %vm50, %v280, 0.0
  %305 = vadd.xlane.f32.xlu0 %v304
  %v306 = vpop.xlane.xlu0 %305
  %v307 = vsel %vm50, %v281, 0.0
  %308 = vadd.xlane.f32.xlu0 %v307
  %v309 = vpop.xlane.xlu0 %308
  %v310 = vsel %vm50, %v282, 0.0
  %311 = vadd.xlane.f32.xlu0 %v310
  %v312 = vpop.xlane.xlu0 %311
  %v313 = vsel %vm50, %v283, 0.0
  %314 = vadd.xlane.f32.xlu0 %v313
  %v315 = vpop.xlane.xlu0 %314
  %v316 = vsel %vm50, %v284, 0.0
  %317 = vadd.xlane.f32.xlu0 %v316
  %v318 = vpop.xlane.xlu0 %317
  %v319 = vsel %vm50, %v285, 0.0
  %320 = vadd.xlane.f32.xlu0 %v319
  %v321 = vpop.xlane.xlu0 %320
  %v322 = vsel %vm50, %v286, 0.0
  %323 = vadd.xlane.f32.xlu0 %v322
  %v324 = vpop.xlane.xlu0 %323
  %v325 = vsel %vm50, %v287, 0.0
  %326 = vadd.xlane.f32.xlu0 %v325
  %v327 = vpop.xlane.xlu0 %326
  %v328 = vsel %vm50, %v288, 0.0
  %329 = vadd.xlane.f32.xlu0 %v328
  %v330 = vpop.xlane.xlu0 %329
  %v331 = vsel %vm50, %v289, 0.0
  %332 = vadd.xlane.f32.xlu0 %v331
  %v333 = vpop.xlane.xlu0 %332
  %v334 = vsel %vm50, %v290, 0.0
  %335 = vadd.xlane.f32.xlu0 %v334
  %v336 = vpop.xlane.xlu0 %335
  %v337 = vsel %vm50, %v291, 0.0
  %338 = vadd.xlane.f32.xlu0 %v337
  %v339 = vpop.xlane.xlu0 %338
  %v340 = vadd.f32 %v230, %v294
  %v341 = vadd.f32 %v233, %v297
  %v342 = vadd.f32 %v236, %v300
  %v343 = vadd.f32 %v239, %v303
  %v344 = vadd.f32 %v242, %v306
  %v345 = vadd.f32 %v245, %v309
  %v346 = vadd.f32 %v248, %v312
  %v347 = vadd.f32 %v251, %v315
  %v348 = vadd.f32 %v254, %v318
  %v349 = vadd.f32 %v257, %v321
  %v350 = vadd.f32 %v260, %v324
  %v351 = vadd.f32 %v263, %v327
  %v352 = vadd.f32 %v266, %v330
  %v353 = vadd.f32 %v269, %v333
  %v354 = vadd.f32 %v272, %v336
  %v355 = vadd.f32 %v275, %v339
  %v356 = vmul.f32 %v340, %v163
  %v357 = vmul.f32 %v341, %v163
  %v358 = vmul.f32 %v342, %v163
  %v359 = vmul.f32 %v343, %v163
  %v360 = vmul.f32 %v344, %v163
  %v361 = vmul.f32 %v345, %v163
  %v362 = vmul.f32 %v346, %v163
  %v363 = vmul.f32 %v347, %v163
  %v364 = vmul.f32 %v348, %v163
  %v365 = vmul.f32 %v349, %v163
  %v366 = vmul.f32 %v350, %v163
  %v367 = vmul.f32 %v351, %v163
  %v368 = vmul.f32 %v352, %v163
  %v369 = vmul.f32 %v353, %v163
  %v370 = vmul.f32 %v354, %v163
  %v371 = vmul.f32 %v355, %v163
  %v372 = vadd.f32 %v356, 1e-05
  %v373 = vadd.f32 %v357, 1e-05
  %v374 = vadd.f32 %v358, 1e-05
  %v375 = vadd.f32 %v359, 1e-05
  %v376 = vadd.f32 %v360, 1e-05
  %v377 = vadd.f32 %v361, 1e-05
  %v378 = vadd.f32 %v362, 1e-05
  %v379 = vadd.f32 %v363, 1e-05
  %v380 = vadd.f32 %v364, 1e-05
  %v381 = vadd.f32 %v365, 1e-05
  %v382 = vadd.f32 %v366, 1e-05
  %v383 = vadd.f32 %v367, 1e-05
  %v384 = vadd.f32 %v368, 1e-05
  %v385 = vadd.f32 %v369, 1e-05
  %v386 = vadd.f32 %v370, 1e-05
  %v387 = vadd.f32 %v371, 1e-05
  %v388 = vrsqrt.pop %v372
  %v389 = vrsqrt.pop %v373
  %v390 = vrsqrt.pop %v374
  %v391 = vrsqrt.pop %v375
  %v392 = vrsqrt.pop %v376
  %v393 = vrsqrt.pop %v377
  %v394 = vrsqrt.pop %v378
  %v395 = vrsqrt.pop %v379
  %v396 = vrsqrt.pop %v380
  %v397 = vrsqrt.pop %v381
  %v398 = vrsqrt.pop %v382
  %v399 = vrsqrt.pop %v383
  %v400 = vrsqrt.pop %v384
  %v401 = vrsqrt.pop %v385
  %v402 = vrsqrt.pop %v386
  %v403 = vrsqrt.pop %v387
  %v404 = vmul.f32 %v180, %v388
  %v405 = vmul.f32 %v181, %v389
  %v406 = vmul.f32 %v182, %v390
  %v407 = vmul.f32 %v183, %v391
  %v408 = vmul.f32 %v184, %v392
  %v409 = vmul.f32 %v185, %v393
  %v410 = vmul.f32 %v186, %v394
  %v411 = vmul.f32 %v187, %v395
  %v412 = vmul.f32 %v188, %v396
  %v413 = vmul.f32 %v189, %v397
  %v414 = vmul.f32 %v190, %v398
  %v415 = vmul.f32 %v191, %v399
  %v416 = vmul.f32 %v192, %v400
  %v417 = vmul.f32 %v193, %v401
  %v418 = vmul.f32 %v194, %v402
  %v419 = vmul.f32 %v195, %v403
  %v420 = vpack.c.bf16 %v405, %v404
  %v421 = vpack.c.bf16 %v407, %v406
  %v422 = vpack.c.bf16 %v409, %v408
  %v423 = vpack.c.bf16 %v411, %v410
  %v424 = vpack.c.bf16 %v413, %v412
  %v425 = vpack.c.bf16 %v415, %v414
  %v426 = vpack.c.bf16 %v417, %v416
  %v427 = vpack.c.bf16 %v419, %v418
  %v428 = vld [vmem:[%s1] sm:$0xf]
  %v429 = vmul.f32 %v196, %v388
  %v430 = vmul.f32 %v197, %v389
  %v431 = vmul.f32 %v198, %v390
  %v432 = vmul.f32 %v199, %v391
  %v433 = vmul.f32 %v200, %v392
  %v434 = vmul.f32 %v201, %v393
  %v435 = vmul.f32 %v202, %v394
  %v436 = vmul.f32 %v203, %v395
  %v437 = vmul.f32 %v204, %v396
  %v438 = vmul.f32 %v205, %v397
  %v439 = vmul.f32 %v206, %v398
  %v440 = vmul.f32 %v207, %v399
  %v441 = vmul.f32 %v208, %v400
  %v442 = vmul.f32 %v209, %v401
  %v443 = vmul.f32 %v210, %v402
  %v444 = vmul.f32 %v211, %v403
  %v445 = vpack.c.bf16 %v430, %v429
  %v446 = vpack.c.bf16 %v432, %v431
  %v447 = vpack.c.bf16 %v434, %v433
  %v448 = vpack.c.bf16 %v436, %v435
  %v449 = vpack.c.bf16 %v438, %v437
  %v450 = vpack.c.bf16 %v440, %v439
  %v451 = vpack.c.bf16 %v442, %v441
  %v452 = vpack.c.bf16 %v444, %v443
  %v453 = vld [vmem:[%s2] sm:$0xf]
  %v455 = vsel %vm50, %v445, 0
  %v458 = vsel %vm50, %v446, 0
  %v461 = vsel %vm50, %v447, 0
  %v464 = vsel %vm50, %v448, 0
  %v467 = vsel %vm50, %v449, 0
  %v470 = vsel %vm50, %v450, 0
  %v473 = vsel %vm50, %v451, 0
  %v476 = vsel %vm50, %v452, 0
  %vm478 = vcmask 1043456
  %v480 = vsel %vm478, %v453, 0
  %482 = vmatprep.subr.bf16.mxu0 0
  %483 = vmatpush1.bf16.msra.mxu0 %v480
  %484 = vmatprep.subr.bf16.mxu0 0
  %485 = vmatpush1.bf16.msra.mxu0 0
  %486 = vmatprep.subr.bf16.mxu0 0
  %487 = vmatpush1.bf16.msra.mxu0 0
  %488 = vmatprep.subr.bf16.mxu0 0
  %489 = vmatpush1.bf16.msra.mxu0 0
  %490 = vmatprep.subr.bf16.mxu0 0
  %491 = vmatpush1.bf16.msra.mxu0 0
  %492 = vmatprep.subr.bf16.mxu0 0
  %493 = vmatpush1.bf16.msra.mxu0 0
  %494 = vmatprep.subr.bf16.mxu0 0
  %495 = vmatpush1.bf16.msra.mxu0 0
  %496 = vmatprep.subr.bf16.mxu0 0
  %497 = vmatpush1.bf16.msra.mxu0 0
  %498 = vmatprep.subr.bf16.mxu0 0
  %499 = vmatpush1.bf16.msra.mxu0 0
  %500 = vmatprep.subr.bf16.mxu0 0
  %501 = vmatpush1.bf16.msra.mxu0 0
  %502 = vmatprep.subr.bf16.mxu0 0
  %503 = vmatpush1.bf16.msra.mxu0 0
  %504 = vmatprep.subr.bf16.mxu0 0
  %505 = vmatpush1.bf16.msra.mxu0 0
  %506 = vmatprep.subr.bf16.mxu0 0
  %507 = vmatpush1.bf16.msra.mxu0 0
  %508 = vmatprep.subr.bf16.mxu0 0
  %509 = vmatpush1.bf16.msra.mxu0 0
  %510 = vmatprep.subr.bf16.mxu0 0
  %511 = vmatpush1.bf16.msra.mxu0 0
  %512 = vmatprep.subr.bf16.mxu0 0
  %513 = vmatpush1.bf16.msra.mxu0 0
  %514 = vmatprep.mubr.bf16.mxu0 0
  %515 = vmatmul.mubr.bf16.gmra.mrb[0].mxu0 %v455
  %v516 = vpop.f32.mrb[0].mxu0
  %v517 = vadd.f32 0.0, %v516
  %v518 = vpop.f32.mrb[0].mxu0
  %v519 = vpop.f32.mrb[0].mxu0
  %v520 = vadd.f32 0.0, %v519
  %v521 = vpop.f32.mrb[0].mxu0
  %522 = vmatprep.mubr.bf16.mxu0 0
  %523 = vmatmul.mubr.bf16.gmra.mrb[0].mxu0 %v458
  %v524 = vpop.f32.mrb[0].mxu0
  %v525 = vadd.f32 0.0, %v524
  %v526 = vpop.f32.mrb[0].mxu0
  %v527 = vpop.f32.mrb[0].mxu0
  %v528 = vadd.f32 0.0, %v527
  %v529 = vpop.f32.mrb[0].mxu0
  %530 = vmatprep.mubr.bf16.mxu0 0
  %531 = vmatmul.mubr.bf16.gmra.mrb[0].mxu0 %v461
  %v532 = vpop.f32.mrb[0].mxu0
  %v533 = vadd.f32 0.0, %v532
  %v534 = vpop.f32.mrb[0].mxu0
  %v535 = vpop.f32.mrb[0].mxu0
  %v536 = vadd.f32 0.0, %v535
  %v537 = vpop.f32.mrb[0].mxu0
  %538 = vmatprep.mubr.bf16.mxu0 0
  %539 = vmatmul.mubr.bf16.gmra.mrb[0].mxu0 %v464
  %v540 = vpop.f32.mrb[0].mxu0
  %v541 = vadd.f32 0.0, %v540
  %v542 = vpop.f32.mrb[0].mxu0
  %v543 = vpop.f32.mrb[0].mxu0
  %v544 = vadd.f32 0.0, %v543
  %v545 = vpop.f32.mrb[0].mxu0
  %546 = vmatprep.mubr.bf16.mxu0 0
  %547 = vmatmul.mubr.bf16.gmra.mrb[0].mxu0 %v467
  %v548 = vpop.f32.mrb[0].mxu0
  %v549 = vadd.f32 0.0, %v548
  %v550 = vpop.f32.mrb[0].mxu0
  %v551 = vpop.f32.mrb[0].mxu0
  %v552 = vadd.f32 0.0, %v551
  %v553 = vpop.f32.mrb[0].mxu0
  %554 = vmatprep.mubr.bf16.mxu0 0
  %555 = vmatmul.mubr.bf16.gmra.mrb[0].mxu0 %v470
  %v556 = vpop.f32.mrb[0].mxu0
  %v557 = vadd.f32 0.0, %v556
  %v558 = vpop.f32.mrb[0].mxu0
  %v559 = vpop.f32.mrb[0].mxu0
  %v560 = vadd.f32 0.0, %v559
  %v561 = vpop.f32.mrb[0].mxu0
  %562 = vmatprep.mubr.bf16.mxu0 0
  %563 = vmatmul.mubr.bf16.gmra.mrb[0].mxu0 %v473
  %v564 = vpop.f32.mrb[0].mxu0
  %v565 = vadd.f32 0.0, %v564
  %v566 = vpop.f32.mrb[0].mxu0
  %v567 = vpop.f32.mrb[0].mxu0
  %v568 = vadd.f32 0.0, %v567
  %v569 = vpop.f32.mrb[0].mxu0
  %570 = vmatprep.mubr.bf16.mxu0 0
  %571 = vmatmul.mubr.bf16.gmra.mrb[0].mxu0 %v476
  %v572 = vpop.f32.mrb[0].mxu0
  %v573 = vadd.f32 0.0, %v572
  %v574 = vpop.f32.mrb[0].mxu0
  %v575 = vpop.f32.mrb[0].mxu0
  %v576 = vadd.f32 0.0, %v575
  %v577 = vpop.f32.mrb[0].mxu0
  %578 = vdwg.mxu0
  %v580 = vsel %vm50, %v420, 0
  %v583 = vsel %vm50, %v421, 0
  %v586 = vsel %vm50, %v422, 0
  %v589 = vsel %vm50, %v423, 0
  %v592 = vsel %vm50, %v424, 0
  %v595 = vsel %vm50, %v425, 0
  %v598 = vsel %vm50, %v426, 0
  %v601 = vsel %vm50, %v427, 0
  %v604 = vsel %vm478, %v428, 0
  %606 = vmatprep.subr.bf16.mxu0 0
  %607 = vmatpush1.bf16.msra.mxu0 %v604
  %608 = vmatprep.subr.bf16.mxu0 0
  %609 = vmatpush1.bf16.msra.mxu0 0
  %610 = vmatprep.subr.bf16.mxu0 0
  %611 = vmatpush1.bf16.msra.mxu0 0
  %612 = vmatprep.subr.bf16.mxu0 0
  %613 = vmatpush1.bf16.msra.mxu0 0
  %614 = vmatprep.subr.bf16.mxu0 0
  %615 = vmatpush1.bf16.msra.mxu0 0
  %616 = vmatprep.subr.bf16.mxu0 0
  %617 = vmatpush1.bf16.msra.mxu0 0
  %618 = vmatprep.subr.bf16.mxu0 0
  %619 = vmatpush1.bf16.msra.mxu0 0
  %620 = vmatprep.subr.bf16.mxu0 0
  %621 = vmatpush1.bf16.msra.mxu0 0
  %622 = vmatprep.subr.bf16.mxu0 0
  %623 = vmatpush1.bf16.msra.mxu0 0
  %624 = vmatprep.subr.bf16.mxu0 0
  %625 = vmatpush1.bf16.msra.mxu0 0
  %626 = vmatprep.subr.bf16.mxu0 0
  %627 = vmatpush1.bf16.msra.mxu0 0
  %628 = vmatprep.subr.bf16.mxu0 0
  %629 = vmatpush1.bf16.msra.mxu0 0
  %630 = vmatprep.subr.bf16.mxu0 0
  %631 = vmatpush1.bf16.msra.mxu0 0
  %632 = vmatprep.subr.bf16.mxu0 0
  %633 = vmatpush1.bf16.msra.mxu0 0
  %634 = vmatprep.subr.bf16.mxu0 0
  %635 = vmatpush1.bf16.msra.mxu0 0
  %636 = vmatprep.subr.bf16.mxu0 0
  %637 = vmatpush1.bf16.msra.mxu0 0
  %638 = vmatprep.mubr.bf16.mxu0 0
  %639 = vmatmul.mubr.bf16.gmra.mrb[0].mxu0 %v580
  %v640 = vpop.f32.mrb[0].mxu0
  %v641 = vadd.f32 %v517, %v640
  %v642 = vpop.f32.mrb[0].mxu0
  %v643 = vpop.f32.mrb[0].mxu0
  %v644 = vadd.f32 %v520, %v643
  %v645 = vpop.f32.mrb[0].mxu0
  %646 = vmatprep.mubr.bf16.mxu0 0
  %647 = vmatmul.mubr.bf16.gmra.mrb[0].mxu0 %v583
  %v648 = vpop.f32.mrb[0].mxu0
  %v649 = vadd.f32 %v525, %v648
  %v650 = vpop.f32.mrb[0].mxu0
  %v651 = vpop.f32.mrb[0].mxu0
  %v652 = vadd.f32 %v528, %v651
  %v653 = vpop.f32.mrb[0].mxu0
  %654 = vmatprep.mubr.bf16.mxu0 0
  %655 = vmatmul.mubr.bf16.gmra.mrb[0].mxu0 %v586
  %v656 = vpop.f32.mrb[0].mxu0
  %v657 = vadd.f32 %v533, %v656
  %v658 = vpop.f32.mrb[0].mxu0
  %v659 = vpop.f32.mrb[0].mxu0
  %v660 = vadd.f32 %v536, %v659
  %v661 = vpop.f32.mrb[0].mxu0
  %662 = vmatprep.mubr.bf16.mxu0 0
  %663 = vmatmul.mubr.bf16.gmra.mrb[0].mxu0 %v589
  %v664 = vpop.f32.mrb[0].mxu0
  %v665 = vadd.f32 %v541, %v664
  %v666 = vpop.f32.mrb[0].mxu0
  %v667 = vpop.f32.mrb[0].mxu0
  %v668 = vadd.f32 %v544, %v667
  %v669 = vpop.f32.mrb[0].mxu0
  %670 = vmatprep.mubr.bf16.mxu0 0
  %671 = vmatmul.mubr.bf16.gmra.mrb[0].mxu0 %v592
  %v672 = vpop.f32.mrb[0].mxu0
  %v673 = vadd.f32 %v549, %v672
  %v674 = vpop.f32.mrb[0].mxu0
  %v675 = vpop.f32.mrb[0].mxu0
  %v676 = vadd.f32 %v552, %v675
  %v677 = vpop.f32.mrb[0].mxu0
  %678 = vmatprep.mubr.bf16.mxu0 0
  %679 = vmatmul.mubr.bf16.gmra.mrb[0].mxu0 %v595
  %v680 = vpop.f32.mrb[0].mxu0
  %v681 = vadd.f32 %v557, %v680
  %v682 = vpop.f32.mrb[0].mxu0
  %v683 = vpop.f32.mrb[0].mxu0
  %v684 = vadd.f32 %v560, %v683
  %v685 = vpop.f32.mrb[0].mxu0
  %686 = vmatprep.mubr.bf16.mxu0 0
  %687 = vmatmul.mubr.bf16.gmra.mrb[0].mxu0 %v598
  %v688 = vpop.f32.mrb[0].mxu0
  %v689 = vadd.f32 %v565, %v688
  %v690 = vpop.f32.mrb[0].mxu0
  %v691 = vpop.f32.mrb[0].mxu0
  %v692 = vadd.f32 %v568, %v691
  %v693 = vpop.f32.mrb[0].mxu0
  %694 = vmatprep.mubr.bf16.mxu0 0
  %695 = vmatmul.mubr.bf16.gmra.mrb[0].mxu0 %v601
  %v696 = vpop.f32.mrb[0].mxu0
  %v697 = vadd.f32 %v573, %v696
  %v698 = vpop.f32.mrb[0].mxu0
  %v699 = vpop.f32.mrb[0].mxu0
  %v700 = vadd.f32 %v576, %v699
  %v701 = vpop.f32.mrb[0].mxu0
  %702 = vdwg.mxu0
  %v703 = vld [vmem:[%s3] sm:$0x1]
  %v705 = vlaneseq
  %v706 = vshrl.u32 %v705, 7
  %v707 = vsub.s32 0, %v706
  %v708 = vrot.slane %v703, %v707
  %v710 = vadd.f32 %v641, %v708
  %v711 = vadd.f32 %v644, %v708
  %v712 = vadd.f32 %v649, %v708
  %v713 = vadd.f32 %v652, %v708
  %v714 = vadd.f32 %v657, %v708
  %v715 = vadd.f32 %v660, %v708
  %v716 = vadd.f32 %v665, %v708
  %v717 = vadd.f32 %v668, %v708
  %v718 = vadd.f32 %v673, %v708
  %v719 = vadd.f32 %v676, %v708
  %v720 = vadd.f32 %v681, %v708
  %v721 = vadd.f32 %v684, %v708
  %v722 = vadd.f32 %v689, %v708
  %v723 = vadd.f32 %v692, %v708
  %v724 = vadd.f32 %v697, %v708
  %v725 = vadd.f32 %v700, %v708
  %726 = vst.msk [vmem:[%s4] sm:$0xff] %vm50, %v710
  %727 = vst.msk [vmem:[%s4 + $0x8] sm:$0xff] %vm50, %v711
  %728 = vst.msk [vmem:[%s4 + $0x10] sm:$0xff] %vm50, %v712
  %729 = vst.msk [vmem:[%s4 + $0x18] sm:$0xff] %vm50, %v713
  %730 = vst.msk [vmem:[%s4 + $0x20] sm:$0xff] %vm50, %v714
  %731 = vst.msk [vmem:[%s4 + $0x28] sm:$0xff] %vm50, %v715
  %732 = vst.msk [vmem:[%s4 + $0x30] sm:$0xff] %vm50, %v716
  %733 = vst.msk [vmem:[%s4 + $0x38] sm:$0xff] %vm50, %v717
  %734 = vst.msk [vmem:[%s4 + $0x40] sm:$0xff] %vm50, %v718
  %735 = vst.msk [vmem:[%s4 + $0x48] sm:$0xff] %vm50, %v719
  %736 = vst.msk [vmem:[%s4 + $0x50] sm:$0xff] %vm50, %v720
  %737 = vst.msk [vmem:[%s4 + $0x58] sm:$0xff] %vm50, %v721
  %738 = vst.msk [vmem:[%s4 + $0x60] sm:$0xff] %vm50, %v722
  %739 = vst.msk [vmem:[%s4 + $0x68] sm:$0xff] %vm50, %v723
  %740 = vst.msk [vmem:[%s4 + $0x70] sm:$0xff] %vm50, %v724
  %741 = vst.msk [vmem:[%s4 + $0x78] sm:$0xff] %vm50, %v725
  // Predicated region
  $region18: #{tpu_custom_call.1} parent=0 // pred_check
    _
  $region19: #{tpu_custom_call.1} parent=0 // pred_check_branch
    %743 = sbr.rel (0) target = $region21
  $region20: #{tpu_custom_call.1} parent=0 // pred_region
    _
  $region21: #{tpu_custom_call.1} parent=0 // pred_fallthru
    _
  // Predicated region
  $region22: #{tpu_custom_call.1} parent=0 // pred_check
    _
  $region23: #{tpu_custom_call.1} parent=0 // pred_check_branch
    %745 = sbr.rel (0) target = $region25
  $region24: #{tpu_custom_call.1} parent=0 // pred_region
    _
  $region25: #{tpu_custom_call.1} parent=0 // pred_fallthru
    _

</llo_original>
